<compile_context>
chip_gen: v7x
topology: tpu7x:2x2x1
jax: 0.10.0
libtpu: 0.0.40
codegen_flags: <defaults>
</compile_context>

<pallas_src>
import math

import jax
import jax.numpy as jnp
from jax import lax
from jax.experimental import pallas as pl
from jax.experimental.pallas import tpu as pltpu


def depression_kernel(xp_ref, wk_ref, bk_ref, wv_ref, bv_ref, wd_ref, o_ref):
    # xp_ref : (1, H+2, W+2, C)  zero-padded input, NHWC, channels on lanes
    # wk_ref : (9, C)   depthwise 3x3 taps of self.key   (row = dy*3 + dx)
    # bk_ref : (1, C)   bias of self.key
    # wv_ref : (9, C)   depthwise 3x3 taps of self.value
    # bv_ref : (1, C)   bias of self.value
    # wd_ref : (1, C)   (proto[0] - proto[1]) / sqrt(C)   (folded softmax/1x1 conv)
    # o_ref  : (1, H, W, C)
    H, W, C = o_ref.shape[1], o_ref.shape[2], o_ref.shape[3]

    # Small weight tiles: load once, stay in vregs across the row loop.
    wk = wk_ref[...].astype(jnp.float32)
    wv = wv_ref[...].astype(jnp.float32)
    bk = bk_ref[...].astype(jnp.float32)
    bv = bv_ref[...].astype(jnp.float32)
    wd = wd_ref[...].astype(jnp.float32)

    def row_body(r, carry):
        # Accumulate both depthwise convs for output row r (bias init).
        key = jnp.broadcast_to(bk, (W, C))
        val = jnp.broadcast_to(bv, (W, C))
        for dy in range(3):
            # Padded input row r+dy: (W+2, C); re-read from VMEM per tap-row
            # so no large f32 tile stays live across the whole kernel.
            row = xp_ref[0, pl.ds(r + dy, 1)][0].astype(jnp.float32)
            for dx in range(3):
                win = row[dx:dx + W, :]                       # (W, C) shifted window
                tap = dy * 3 + dx
                key = key + win * wk[tap]                     # VPU FMA, per-channel tap
                val = val + win * wv[tap]
        # softmax([l0, l1] / sqrt(C))[0] == sigmoid((l0 - l1) / sqrt(C)); the
        # 1/sqrt(C) and the prototype difference are folded into wd.
        gate = jax.nn.sigmoid(
            jnp.sum(key * wd, axis=-1, keepdims=True))        # (W, 1), XLU reduce + EUP
        o_ref[0, pl.ds(r, 1)] = (gate * val)[None].astype(o_ref.dtype)
        return carry

    lax.fori_loop(0, H, row_body, 0)


def depression(x, w_key, b_key, w_value, b_value, w_proto):
    """Pallas implementation of Depression.forward.

    x        : (B, C, H, W) float32 (PyTorch NCHW layout)
    w_key    : (C, 1, 3, 3) depthwise conv weight of self.key
    b_key    : (C,)         bias of self.key
    w_value  : (C, 1, 3, 3) depthwise conv weight of self.value
    b_value  : (C,)         bias of self.value
    w_proto  : (2, C, 1, 1) 1x1 conv weight of self.prototypes (bias=False)
    returns  : (B, C, H, W)
    """
    B, C, H, W = x.shape
    assert w_key.shape == (C, 1, 3, 3) and w_value.shape == (C, 1, 3, 3)
    assert w_proto.shape == (2, C, 1, 1)

    # ---- wrapper-side layout plumbing (cheap XLA ops, outside the kernel) ----
    x_nhwc = jnp.transpose(x, (0, 2, 3, 1))                      # (B, H, W, C)
    xp = jnp.pad(x_nhwc, ((0, 0), (1, 1), (1, 1), (0, 0)))       # zero-pad H, W

    wk9 = jnp.transpose(w_key.reshape(C, 9), (1, 0))             # (9, C), lane-dense
    wv9 = jnp.transpose(w_value.reshape(C, 9), (1, 0))
    bk = b_key.reshape(1, C)
    bv = b_value.reshape(1, C)
    wd = ((w_proto[0, :, 0, 0] - w_proto[1, :, 0, 0]) / math.sqrt(C)).reshape(1, C)

    out_nhwc = pl.pallas_call(
        depression_kernel,
        out_shape=jax.ShapeDtypeStruct((B, H, W, C), x.dtype),
        grid=(B,),
        in_specs=[
            pl.BlockSpec((1, H + 2, W + 2, C), lambda b: (b, 0, 0, 0)),
            pl.BlockSpec((9, C), lambda b: (0, 0)),   # weights stay resident in VMEM
            pl.BlockSpec((1, C), lambda b: (0, 0)),
            pl.BlockSpec((9, C), lambda b: (0, 0)),
            pl.BlockSpec((1, C), lambda b: (0, 0)),
            pl.BlockSpec((1, C), lambda b: (0, 0)),
        ],
        out_specs=pl.BlockSpec((1, H, W, C), lambda b: (b, 0, 0, 0)),
        compiler_params=pltpu.CompilerParams(
            dimension_semantics=("parallel",)),       # batch axis -> megacore on v7x
    )(xp, wk9, bk, wv9, bv, wd)

    return jnp.transpose(out_nhwc, (0, 3, 1, 2))


def depression_ref(x, w_key, b_key, w_value, b_value, w_proto):
    """Plain-JAX reference mirroring the PyTorch module (NCHW convs + softmax)."""
    B, C, H, W = x.shape
    dn = ("NCHW", "OIHW", "NCHW")
    hp = lax.Precision.HIGHEST
    key = lax.conv_general_dilated(
        x, w_key, window_strides=(1, 1), padding=((1, 1), (1, 1)),
        dimension_numbers=dn, feature_group_count=C, precision=hp)
    key = key + b_key[None, :, None, None]
    logits = lax.conv_general_dilated(
        key, w_proto, window_strides=(1, 1), padding=((0, 0), (0, 0)),
        dimension_numbers=dn, precision=hp)
    gate = jax.nn.softmax(logits / math.sqrt(C), axis=1)[:, 0:1]
    value = lax.conv_general_dilated(
        x, w_value, window_strides=(1, 1), padding=((1, 1), (1, 1)),
        dimension_numbers=dn, feature_group_count=C, precision=hp)
    value = value + b_value[None, :, None, None]
    return gate * value


if __name__ == "__main__":
    # Small but representative shapes: lane-dense channel count.
    B, C, H, W = 2, 128, 16, 16

    key = jax.random.PRNGKey(0)
    kx, k1, k2, k3, k4, k5 = jax.random.split(key, 6)

    x = jax.random.normal(kx, (B, C, H, W), dtype=jnp.float32)

    # Deterministic PyTorch-Conv2d-style init bounds.
    bound_dw = 1.0 / math.sqrt(9.0)        # depthwise: fan_in = 1*3*3
    bound_pr = 1.0 / math.sqrt(float(C))   # prototypes: fan_in = C*1*1
    w_key = jax.random.uniform(k1, (C, 1, 3, 3), jnp.float32, -bound_dw, bound_dw)
    b_key = jax.random.uniform(k2, (C,), jnp.float32, -bound_dw, bound_dw)
    w_value = jax.random.uniform(k3, (C, 1, 3, 3), jnp.float32, -bound_dw, bound_dw)
    b_value = jax.random.uniform(k4, (C,), jnp.float32, -bound_dw, bound_dw)
    w_proto = jax.random.uniform(k5, (2, C, 1, 1), jnp.float32, -bound_pr, bound_pr)

    out = depression(x, w_key, b_key, w_value, b_value, w_proto)
    out = jax.block_until_ready(out)

    ref = depression_ref(x, w_key, b_key, w_value, b_value, w_proto)
    assert out.shape == (B, C, H, W)
    assert jnp.allclose(out, ref, atol=1e-4, rtol=1e-4), "mismatch vs reference"

    print("KERNEL_OK")
</pallas_src>

<mosaic_0001>
module attributes {stable_mosaic.version = 11 : i64} {
  func.func @depression_kernel(%arg0: i32, %arg1: memref<1x18x18x128xf32, #tpu.memory_space<vmem>>, %arg2: memref<9x128xf32, #tpu.memory_space<vmem>>, %arg3: memref<1x128xf32, #tpu.memory_space<vmem>>, %arg4: memref<9x128xf32, #tpu.memory_space<vmem>>, %arg5: memref<1x128xf32, #tpu.memory_space<vmem>>, %arg6: memref<1x128xf32, #tpu.memory_space<vmem>>, %arg7: memref<1x16x16x128xf32, #tpu.memory_space<vmem>>) attributes {dimension_semantics = [#tpu.dimension_semantics<parallel>], iteration_bounds = array<i64: 2>, scalar_prefetch = 0 : i64, scratch_operands = 0 : i64, tpu.core_type = #tpu.core_type<tc>, window_params = [{transform_indices = @transform_0, window_bounds = array<i64: 1, 18, 18, 128>}, {pipeline_mode = #tpu.pipeline_mode<synchronous>, transform_indices = @transform_1, window_bounds = array<i64: 9, 128>}, {pipeline_mode = #tpu.pipeline_mode<synchronous>, transform_indices = @transform_2, window_bounds = array<i64: 1, 128>}, {pipeline_mode = #tpu.pipeline_mode<synchronous>, transform_indices = @transform_3, window_bounds = array<i64: 9, 128>}, {pipeline_mode = #tpu.pipeline_mode<synchronous>, transform_indices = @transform_4, window_bounds = array<i64: 1, 128>}, {pipeline_mode = #tpu.pipeline_mode<synchronous>, transform_indices = @transform_5, window_bounds = array<i64: 1, 128>}, {transform_indices = @transform_6, window_bounds = array<i64: 1, 16, 16, 128>}]} {
    %c0 = arith.constant 0 : index
    %c0_0 = arith.constant 0 : index
    %0 = vector.load %arg2[%c0, %c0_0] : memref<9x128xf32, #tpu.memory_space<vmem>>, vector<9x128xf32>
    %c0_1 = arith.constant 0 : index
    %c0_2 = arith.constant 0 : index
    %1 = vector.load %arg4[%c0_1, %c0_2] : memref<9x128xf32, #tpu.memory_space<vmem>>, vector<9x128xf32>
    %c0_3 = arith.constant 0 : index
    %c0_4 = arith.constant 0 : index
    %2 = vector.load %arg3[%c0_3, %c0_4] : memref<1x128xf32, #tpu.memory_space<vmem>>, vector<1x128xf32>
    %c0_5 = arith.constant 0 : index
    %c0_6 = arith.constant 0 : index
    %3 = vector.load %arg5[%c0_5, %c0_6] : memref<1x128xf32, #tpu.memory_space<vmem>>, vector<1x128xf32>
    %c0_7 = arith.constant 0 : index
    %c0_8 = arith.constant 0 : index
    %4 = vector.load %arg6[%c0_7, %c0_8] : memref<1x128xf32, #tpu.memory_space<vmem>>, vector<1x128xf32>
    %c0_i32 = arith.constant 0 : i32
    %c16_i32 = arith.constant 16 : i32
    %5 = arith.addi %c0_i32, %c16_i32 : i32
    %c1_i32 = arith.constant 1 : i32
    scf.for %arg8 = %c0_i32 to %5 step %c1_i32  : i32 {
      %6 = vector.shape_cast %2 : vector<1x128xf32> to vector<1x128xf32>
      %7 = vector.broadcast %6 : vector<1x128xf32> to vector<16x128xf32>
      %8 = vector.shape_cast %3 : vector<1x128xf32> to vector<1x128xf32>
      %9 = vector.broadcast %8 : vector<1x128xf32> to vector<16x128xf32>
      %c0_i32_10 = arith.constant 0 : i32
      %10 = arith.addi %arg8, %c0_i32_10 : i32
      %c0_11 = arith.constant 0 : index
      %11 = arith.index_cast %10 : i32 to index
      %c0_12 = arith.constant 0 : index
      %c0_13 = arith.constant 0 : index
      %12 = vector.load %arg1[%c0_11, %11, %c0_12, %c0_13] : memref<1x18x18x128xf32, #tpu.memory_space<vmem>>, vector<1x1x18x128xf32>
      %13 = vector.shape_cast %12 : vector<1x1x18x128xf32> to vector<1x18x128xf32>
      %14 = vector.shape_cast %13 : vector<1x18x128xf32> to vector<18x128xf32>
      %15 = vector.extract_strided_slice %14 {offsets = [0, 0], sizes = [16, 128], strides = [1, 1]} : vector<18x128xf32> to vector<16x128xf32>
      %16 = vector.extract_strided_slice %0 {offsets = [0, 0], sizes = [1, 128], strides = [1, 1]} : vector<9x128xf32> to vector<1x128xf32>
      %17 = vector.shape_cast %16 : vector<1x128xf32> to vector<128xf32>
      %18 = vector.shape_cast %17 : vector<128xf32> to vector<1x128xf32>
      %19 = vector.broadcast %18 : vector<1x128xf32> to vector<16x128xf32>
      %20 = arith.mulf %15, %19 : vector<16x128xf32>
      %21 = arith.addf %7, %20 : vector<16x128xf32>
      %22 = vector.extract_strided_slice %1 {offsets = [0, 0], sizes = [1, 128], strides = [1, 1]} : vector<9x128xf32> to vector<1x128xf32>
      %23 = vector.shape_cast %22 : vector<1x128xf32> to vector<128xf32>
      %24 = vector.shape_cast %23 : vector<128xf32> to vector<1x128xf32>
      %25 = vector.broadcast %24 : vector<1x128xf32> to vector<16x128xf32>
      %26 = arith.mulf %15, %25 : vector<16x128xf32>
      %27 = arith.addf %9, %26 : vector<16x128xf32>
      %28 = vector.extract_strided_slice %14 {offsets = [1, 0], sizes = [16, 128], strides = [1, 1]} : vector<18x128xf32> to vector<16x128xf32>
      %29 = vector.extract_strided_slice %0 {offsets = [1, 0], sizes = [1, 128], strides = [1, 1]} : vector<9x128xf32> to vector<1x128xf32>
      %30 = vector.shape_cast %29 : vector<1x128xf32> to vector<128xf32>
      %31 = vector.shape_cast %30 : vector<128xf32> to vector<1x128xf32>
      %32 = vector.broadcast %31 : vector<1x128xf32> to vector<16x128xf32>
      %33 = arith.mulf %28, %32 : vector<16x128xf32>
      %34 = arith.addf %21, %33 : vector<16x128xf32>
      %35 = vector.extract_strided_slice %1 {offsets = [1, 0], sizes = [1, 128], strides = [1, 1]} : vector<9x128xf32> to vector<1x128xf32>
      %36 = vector.shape_cast %35 : vector<1x128xf32> to vector<128xf32>
      %37 = vector.shape_cast %36 : vector<128xf32> to vector<1x128xf32>
      %38 = vector.broadcast %37 : vector<1x128xf32> to vector<16x128xf32>
      %39 = arith.mulf %28, %38 : vector<16x128xf32>
      %40 = arith.addf %27, %39 : vector<16x128xf32>
      %41 = vector.extract_strided_slice %14 {offsets = [2, 0], sizes = [16, 128], strides = [1, 1]} : vector<18x128xf32> to vector<16x128xf32>
      %42 = vector.extract_strided_slice %0 {offsets = [2, 0], sizes = [1, 128], strides = [1, 1]} : vector<9x128xf32> to vector<1x128xf32>
      %43 = vector.shape_cast %42 : vector<1x128xf32> to vector<128xf32>
      %44 = vector.shape_cast %43 : vector<128xf32> to vector<1x128xf32>
      %45 = vector.broadcast %44 : vector<1x128xf32> to vector<16x128xf32>
      %46 = arith.mulf %41, %45 : vector<16x128xf32>
      %47 = arith.addf %34, %46 : vector<16x128xf32>
      %48 = vector.extract_strided_slice %1 {offsets = [2, 0], sizes = [1, 128], strides = [1, 1]} : vector<9x128xf32> to vector<1x128xf32>
      %49 = vector.shape_cast %48 : vector<1x128xf32> to vector<128xf32>
      %50 = vector.shape_cast %49 : vector<128xf32> to vector<1x128xf32>
      %51 = vector.broadcast %50 : vector<1x128xf32> to vector<16x128xf32>
      %52 = arith.mulf %41, %51 : vector<16x128xf32>
      %53 = arith.addf %40, %52 : vector<16x128xf32>
      %c1_i32_14 = arith.constant 1 : i32
      %54 = arith.addi %arg8, %c1_i32_14 : i32
      %c0_15 = arith.constant 0 : index
      %55 = arith.index_cast %54 : i32 to index
      %c0_16 = arith.constant 0 : index
      %c0_17 = arith.constant 0 : index
      %56 = vector.load %arg1[%c0_15, %55, %c0_16, %c0_17] : memref<1x18x18x128xf32, #tpu.memory_space<vmem>>, vector<1x1x18x128xf32>
      %57 = vector.shape_cast %56 : vector<1x1x18x128xf32> to vector<1x18x128xf32>
      %58 = vector.shape_cast %57 : vector<1x18x128xf32> to vector<18x128xf32>
      %59 = vector.extract_strided_slice %58 {offsets = [0, 0], sizes = [16, 128], strides = [1, 1]} : vector<18x128xf32> to vector<16x128xf32>
      %60 = vector.extract_strided_slice %0 {offsets = [3, 0], sizes = [1, 128], strides = [1, 1]} : vector<9x128xf32> to vector<1x128xf32>
      %61 = vector.shape_cast %60 : vector<1x128xf32> to vector<128xf32>
      %62 = vector.shape_cast %61 : vector<128xf32> to vector<1x128xf32>
      %63 = vector.broadcast %62 : vector<1x128xf32> to vector<16x128xf32>
      %64 = arith.mulf %59, %63 : vector<16x128xf32>
      %65 = arith.addf %47, %64 : vector<16x128xf32>
      %66 = vector.extract_strided_slice %1 {offsets = [3, 0], sizes = [1, 128], strides = [1, 1]} : vector<9x128xf32> to vector<1x128xf32>
      %67 = vector.shape_cast %66 : vector<1x128xf32> to vector<128xf32>
      %68 = vector.shape_cast %67 : vector<128xf32> to vector<1x128xf32>
      %69 = vector.broadcast %68 : vector<1x128xf32> to vector<16x128xf32>
      %70 = arith.mulf %59, %69 : vector<16x128xf32>
      %71 = arith.addf %53, %70 : vector<16x128xf32>
      %72 = vector.extract_strided_slice %58 {offsets = [1, 0], sizes = [16, 128], strides = [1, 1]} : vector<18x128xf32> to vector<16x128xf32>
      %73 = vector.extract_strided_slice %0 {offsets = [4, 0], sizes = [1, 128], strides = [1, 1]} : vector<9x128xf32> to vector<1x128xf32>
      %74 = vector.shape_cast %73 : vector<1x128xf32> to vector<128xf32>
      %75 = vector.shape_cast %74 : vector<128xf32> to vector<1x128xf32>
      %76 = vector.broadcast %75 : vector<1x128xf32> to vector<16x128xf32>
      %77 = arith.mulf %72, %76 : vector<16x128xf32>
      %78 = arith.addf %65, %77 : vector<16x128xf32>
      %79 = vector.extract_strided_slice %1 {offsets = [4, 0], sizes = [1, 128], strides = [1, 1]} : vector<9x128xf32> to vector<1x128xf32>
      %80 = vector.shape_cast %79 : vector<1x128xf32> to vector<128xf32>
      %81 = vector.shape_cast %80 : vector<128xf32> to vector<1x128xf32>
      %82 = vector.broadcast %81 : vector<1x128xf32> to vector<16x128xf32>
      %83 = arith.mulf %72, %82 : vector<16x128xf32>
      %84 = arith.addf %71, %83 : vector<16x128xf32>
      %85 = vector.extract_strided_slice %58 {offsets = [2, 0], sizes = [16, 128], strides = [1, 1]} : vector<18x128xf32> to vector<16x128xf32>
      %86 = vector.extract_strided_slice %0 {offsets = [5, 0], sizes = [1, 128], strides = [1, 1]} : vector<9x128xf32> to vector<1x128xf32>
      %87 = vector.shape_cast %86 : vector<1x128xf32> to vector<128xf32>
      %88 = vector.shape_cast %87 : vector<128xf32> to vector<1x128xf32>
      %89 = vector.broadcast %88 : vector<1x128xf32> to vector<16x128xf32>
      %90 = arith.mulf %85, %89 : vector<16x128xf32>
      %91 = arith.addf %78, %90 : vector<16x128xf32>
      %92 = vector.extract_strided_slice %1 {offsets = [5, 0], sizes = [1, 128], strides = [1, 1]} : vector<9x128xf32> to vector<1x128xf32>
      %93 = vector.shape_cast %92 : vector<1x128xf32> to vector<128xf32>
      %94 = vector.shape_cast %93 : vector<128xf32> to vector<1x128xf32>
      %95 = vector.broadcast %94 : vector<1x128xf32> to vector<16x128xf32>
      %96 = arith.mulf %85, %95 : vector<16x128xf32>
      %97 = arith.addf %84, %96 : vector<16x128xf32>
      %c2_i32 = arith.constant 2 : i32
      %98 = arith.addi %arg8, %c2_i32 : i32
      %c0_18 = arith.constant 0 : index
      %99 = arith.index_cast %98 : i32 to index
      %c0_19 = arith.constant 0 : index
      %c0_20 = arith.constant 0 : index
      %100 = vector.load %arg1[%c0_18, %99, %c0_19, %c0_20] : memref<1x18x18x128xf32, #tpu.memory_space<vmem>>, vector<1x1x18x128xf32>
      %101 = vector.shape_cast %100 : vector<1x1x18x128xf32> to vector<1x18x128xf32>
      %102 = vector.shape_cast %101 : vector<1x18x128xf32> to vector<18x128xf32>
      %103 = vector.extract_strided_slice %102 {offsets = [0, 0], sizes = [16, 128], strides = [1, 1]} : vector<18x128xf32> to vector<16x128xf32>
      %104 = vector.extract_strided_slice %0 {offsets = [6, 0], sizes = [1, 128], strides = [1, 1]} : vector<9x128xf32> to vector<1x128xf32>
      %105 = vector.shape_cast %104 : vector<1x128xf32> to vector<128xf32>
      %106 = vector.shape_cast %105 : vector<128xf32> to vector<1x128xf32>
      %107 = vector.broadcast %106 : vector<1x128xf32> to vector<16x128xf32>
      %108 = arith.mulf %103, %107 : vector<16x128xf32>
      %109 = arith.addf %91, %108 : vector<16x128xf32>
      %110 = vector.extract_strided_slice %1 {offsets = [6, 0], sizes = [1, 128], strides = [1, 1]} : vector<9x128xf32> to vector<1x128xf32>
      %111 = vector.shape_cast %110 : vector<1x128xf32> to vector<128xf32>
      %112 = vector.shape_cast %111 : vector<128xf32> to vector<1x128xf32>
      %113 = vector.broadcast %112 : vector<1x128xf32> to vector<16x128xf32>
      %114 = arith.mulf %103, %113 : vector<16x128xf32>
      %115 = arith.addf %97, %114 : vector<16x128xf32>
      %116 = vector.extract_strided_slice %102 {offsets = [1, 0], sizes = [16, 128], strides = [1, 1]} : vector<18x128xf32> to vector<16x128xf32>
      %117 = vector.extract_strided_slice %0 {offsets = [7, 0], sizes = [1, 128], strides = [1, 1]} : vector<9x128xf32> to vector<1x128xf32>
      %118 = vector.shape_cast %117 : vector<1x128xf32> to vector<128xf32>
      %119 = vector.shape_cast %118 : vector<128xf32> to vector<1x128xf32>
      %120 = vector.broadcast %119 : vector<1x128xf32> to vector<16x128xf32>
      %121 = arith.mulf %116, %120 : vector<16x128xf32>
      %122 = arith.addf %109, %121 : vector<16x128xf32>
      %123 = vector.extract_strided_slice %1 {offsets = [7, 0], sizes = [1, 128], strides = [1, 1]} : vector<9x128xf32> to vector<1x128xf32>
      %124 = vector.shape_cast %123 : vector<1x128xf32> to vector<128xf32>
      %125 = vector.shape_cast %124 : vector<128xf32> to vector<1x128xf32>
      %126 = vector.broadcast %125 : vector<1x128xf32> to vector<16x128xf32>
      %127 = arith.mulf %116, %126 : vector<16x128xf32>
      %128 = arith.addf %115, %127 : vector<16x128xf32>
      %129 = vector.extract_strided_slice %102 {offsets = [2, 0], sizes = [16, 128], strides = [1, 1]} : vector<18x128xf32> to vector<16x128xf32>
      %130 = vector.extract_strided_slice %0 {offsets = [8, 0], sizes = [1, 128], strides = [1, 1]} : vector<9x128xf32> to vector<1x128xf32>
      %131 = vector.shape_cast %130 : vector<1x128xf32> to vector<128xf32>
      %132 = vector.shape_cast %131 : vector<128xf32> to vector<1x128xf32>
      %133 = vector.broadcast %132 : vector<1x128xf32> to vector<16x128xf32>
      %134 = arith.mulf %129, %133 : vector<16x128xf32>
      %135 = arith.addf %122, %134 : vector<16x128xf32>
      %136 = vector.extract_strided_slice %1 {offsets = [8, 0], sizes = [1, 128], strides = [1, 1]} : vector<9x128xf32> to vector<1x128xf32>
      %137 = vector.shape_cast %136 : vector<1x128xf32> to vector<128xf32>
      %138 = vector.shape_cast %137 : vector<128xf32> to vector<1x128xf32>
      %139 = vector.broadcast %138 : vector<1x128xf32> to vector<16x128xf32>
      %140 = arith.mulf %129, %139 : vector<16x128xf32>
      %141 = arith.addf %128, %140 : vector<16x128xf32>
      %142 = vector.broadcast %4 : vector<1x128xf32> to vector<16x128xf32>
      %143 = arith.mulf %135, %142 : vector<16x128xf32>
      %cst = arith.constant dense<0.000000e+00> : vector<16xf32>
      %144 = vector.multi_reduction <add>, %143, %cst [1] : vector<16x128xf32> to vector<16xf32>
      %145 = vector.shape_cast %144 : vector<16xf32> to vector<16x1xf32>
      %146 = arith.negf %145 : vector<16x1xf32>
      %147 = math.exp %146 : vector<16x1xf32>
      %cst_21 = arith.constant 1.000000e+00 : f32
      %148 = vector.broadcast %cst_21 : f32 to vector<16x1xf32>
      %149 = arith.addf %148, %147 : vector<16x1xf32>
      %150 = arith.divf %148, %149 : vector<16x1xf32>
      %151 = vector.broadcast %150 : vector<16x1xf32> to vector<16x128xf32>
      %152 = arith.mulf %151, %141 : vector<16x128xf32>
      %153 = vector.shape_cast %152 : vector<16x128xf32> to vector<1x16x128xf32>
      %c0_22 = arith.constant 0 : index
      %154 = arith.index_cast %arg8 : i32 to index
      %c0_23 = arith.constant 0 : index
      %c0_24 = arith.constant 0 : index
      %155 = vector.load %arg7[%c0_22, %154, %c0_23, %c0_24] : memref<1x16x16x128xf32, #tpu.memory_space<vmem>>, vector<1x1x16x128xf32>
      %156 = vector.shape_cast %155 : vector<1x1x16x128xf32> to vector<1x16x128xf32>
      %157 = vector.shape_cast %153 : vector<1x16x128xf32> to vector<1x1x16x128xf32>
      tpu.vector_store %arg7[%c0_22, %154, %c0_23, %c0_24], %157 {strides = array<i32>} : memref<1x16x16x128xf32, #tpu.memory_space<vmem>>, vector<1x1x16x128xf32>,
    }
    %c16_i32_9 = arith.constant 16 : i32
    return
  }
  func.func @transform_0(%arg0: i32) -> (i32, i32, i32, i32) {
    %c0_i32 = arith.constant 0 : i32
    %c0_i32_0 = arith.constant 0 : i32
    %c0_i32_1 = arith.constant 0 : i32
    %c0_i32_2 = arith.constant 0 : i32
    return %arg0, %c0_i32, %c0_i32_0, %c0_i32_1 : i32, i32, i32, i32
  }
  func.func @transform_1(%arg0: i32) -> (i32, i32) {
    %c0_i32 = arith.constant 0 : i32
    %c0_i32_0 = arith.constant 0 : i32
    %c0_i32_1 = arith.constant 0 : i32
    return %c0_i32, %c0_i32_0 : i32, i32
  }
  func.func @transform_2(%arg0: i32) -> (i32, i32) {
    %c0_i32 = arith.constant 0 : i32
    %c0_i32_0 = arith.constant 0 : i32
    %c0_i32_1 = arith.constant 0 : i32
    return %c0_i32, %c0_i32_0 : i32, i32
  }
  func.func @transform_3(%arg0: i32) -> (i32, i32) {
    %c0_i32 = arith.constant 0 : i32
    %c0_i32_0 = arith.constant 0 : i32
    %c0_i32_1 = arith.constant 0 : i32
    return %c0_i32, %c0_i32_0 : i32, i32
  }
  func.func @transform_4(%arg0: i32) -> (i32, i32) {
    %c0_i32 = arith.constant 0 : i32
    %c0_i32_0 = arith.constant 0 : i32
    %c0_i32_1 = arith.constant 0 : i32
    return %c0_i32, %c0_i32_0 : i32, i32
  }
  func.func @transform_5(%arg0: i32) -> (i32, i32) {
    %c0_i32 = arith.constant 0 : i32
    %c0_i32_0 = arith.constant 0 : i32
    %c0_i32_1 = arith.constant 0 : i32
    return %c0_i32, %c0_i32_0 : i32, i32
  }
  func.func @transform_6(%arg0: i32) -> (i32, i32, i32, i32) {
    %c0_i32 = arith.constant 0 : i32
    %c0_i32_0 = arith.constant 0 : i32
    %c0_i32_1 = arith.constant 0 : i32
    %c0_i32_2 = arith.constant 0 : i32
    return %arg0, %c0_i32, %c0_i32_0, %c0_i32_1 : i32, i32, i32, i32
  }
}

</mosaic_0001>

<llo_original>
// kernel: tpu_custom_call.1
$region0: #{tpu_custom_call.1}
  #allocation0 [shape = 'u32[]', space=smem, size = 0x4, offset = 0x4, fixed_abs, tag = 'smem constant byte address 0x4 - core index']
  #allocation1 [shape = 'u32[144,128]{1,0:T(1,128)}', space=vmem, size = 0x12000, scoped, tag = 'internal scratch']
  %s0 = inlined_call_operand.vmem [shape: f32[2,18,18,128], index: 0, kind: input, shape index: {}]
  %s1 = inlined_call_operand.vmem [shape: f32[9,128], index: 1, kind: input, shape index: {}]
  %s2 = inlined_call_operand.vmem [shape: f32[1,128], index: 2, kind: input, shape index: {}]
  %s3 = inlined_call_operand.vmem [shape: f32[9,128], index: 3, kind: input, shape index: {}]
  %s4 = inlined_call_operand.vmem [shape: f32[1,128], index: 4, kind: input, shape index: {}]
  %s5 = inlined_call_operand.vmem [shape: f32[1,128], index: 5, kind: input, shape index: {}]
  %s6 = inlined_call_operand.hbm [shape: f32[2,16,16,128], index: 6, kind: output, shape index: {}]
  %s7 = sld [smem:[#allocation0]]
  $region64: #{tpu_custom_call.1} parent=0
    _
  %s9 = ssub.s32 1, %s7
  %s10 = scalar_select 0, %s9, %s7
  $region1: #{tpu_custom_call.1} parent=0
    #allocation2 [shape = 'u8[262144]{0}', space=vmem, size = 0x40000, scoped, tag = 'output window, operand 0']
    #allocation3 [shape = 's32[2]{0}', space=sflag, size = 0x8, scoped, tag = 'scoped memory for tpu_custom_call.1']
    %11 = vsyncpa [#allocation3], 0
    %s12 = scalar_lea.sflag [#allocation3], 1
    %13 = vsyncpa %s12, 0
    loop: start=0, step=1, limit=4
    $region2: #{tpu_custom_call.1} parent=1 // loop_pre_header
      _
    $region3: #{tpu_custom_call.1} parent=1 // loop_header
      %s15 = sphi 0, %s19
      %p16 = scmp.ge.s32.totalorder %s15, 4
      %s25 = sphi 0, %s27
      %s28 = sphi 0, %s25
      %s29 = sphi 0, %s28
      %s45 = sphi 0, %s29
      %s49 = sphi 0, %s49
      %s51 = sphi 0, %s49
      %s52 = sphi 0, %s51
      %s66 = sphi 0, %s52
      %s70 = sphi 0, %s70
      %s72 = sphi 0, %s70
      %s73 = sphi 0, %s72
      %s87 = sphi 0, %s73
      %s91 = sphi 0, %s91
      %s93 = sphi 0, %s91
      %s94 = sphi 0, %s93
      %s108 = sphi 0, %s94
      %s112 = sphi 0, %s112
      %s114 = sphi 0, %s112
      %s115 = sphi 0, %s114
      %s129 = sphi 0, %s115
      %s133 = sphi 0, %s133
      %s135 = sphi 0, %s133
      %s136 = sphi 0, %s135
      %s150 = sphi 0, %s136
      %s156 = sphi 0, %s158
      %s159 = sphi 0, %s156
      %s160 = sphi 0, %s159
      %s176 = sphi 0, %s160
    $region4: #{tpu_custom_call.1} parent=1 // loop_header_branch
      %18 = sbr.rel (%p16) target = $region8
    $region5: #{tpu_custom_call.1} parent=1 // loop_body
      %s20 = ssub.s32 %s15, 1
      %s21 = ssub.s32 %s15, 2
      %s22 = sadd.s32 %s15, 1
      %s23 = ssub.s32 %s15, %s22
      %p24 = scmp.eq.s32.totalorder %s23, 0
      %s26 = sadd.s32 %s25, 1
      %s27 = scalar_select %p24, %s25, %s26
      %p30 = pneg %p24
      %p31 = scmp.eq.s32.totalorder %s15, 1
      %p32 = por %p30, %p31
      %p33 = scmp.ne.s32.totalorder %s25, %s28
      %p34 = scmp.eq.s32.totalorder %s15, 0
      %p35 = por %p33, %p34
      %p36 = scmp.ne.s32.totalorder %s25, %s28
      %p37 = scmp.eq.s32.totalorder %s20, 1
      %p38 = por %p36, %p37
      %p39 = scmp.ne.s32.totalorder %s28, %s29
      %p40 = scmp.eq.s32.totalorder %s20, 0
      %p41 = por %p39, %p40
      %p42 = scmp.ne.s32.totalorder %s28, %s29
      %p43 = scmp.eq.s32.totalorder %s21, 1
      %p44 = por %p42, %p43
      %p46 = scmp.ne.s32.totalorder %s29, %s45
      %p47 = scmp.eq.s32.totalorder %s21, 0
      %p48 = por %p46, %p47
      %s50 = sadd.s32 %s49, 1
      %p53 = scmp.eq.s32.totalorder %s15, 1
      %p54 = scmp.ne.s32.totalorder %s49, %s51
      %p55 = scmp.eq.s32.totalorder %s15, 0
      %p56 = por %p54, %p55
      %p57 = scmp.ne.s32.totalorder %s49, %s51
      %p58 = scmp.eq.s32.totalorder %s20, 1
      %p59 = por %p57, %p58
      %p60 = scmp.ne.s32.totalorder %s51, %s52
      %p61 = scmp.eq.s32.totalorder %s20, 0
      %p62 = por %p60, %p61
      %p63 = scmp.ne.s32.totalorder %s51, %s52
      %p64 = scmp.eq.s32.totalorder %s21, 1
      %p65 = por %p63, %p64
      %p67 = scmp.ne.s32.totalorder %s52, %s66
      %p68 = scmp.eq.s32.totalorder %s21, 0
      %p69 = por %p67, %p68
      %s71 = sadd.s32 %s70, 1
      %p74 = scmp.eq.s32.totalorder %s15, 1
      %p75 = scmp.ne.s32.totalorder %s70, %s72
      %p76 = scmp.eq.s32.totalorder %s15, 0
      %p77 = por %p75, %p76
      %p78 = scmp.ne.s32.totalorder %s70, %s72
      %p79 = scmp.eq.s32.totalorder %s20, 1
      %p80 = por %p78, %p79
      %p81 = scmp.ne.s32.totalorder %s72, %s73
      %p82 = scmp.eq.s32.totalorder %s20, 0
      %p83 = por %p81, %p82
      %p84 = scmp.ne.s32.totalorder %s72, %s73
      %p85 = scmp.eq.s32.totalorder %s21, 1
      %p86 = por %p84, %p85
      %p88 = scmp.ne.s32.totalorder %s73, %s87
      %p89 = scmp.eq.s32.totalorder %s21, 0
      %p90 = por %p88, %p89
      %s92 = sadd.s32 %s91, 1
      %p95 = scmp.eq.s32.totalorder %s15, 1
      %p96 = scmp.ne.s32.totalorder %s91, %s93
      %p97 = scmp.eq.s32.totalorder %s15, 0
      %p98 = por %p96, %p97
      %p99 = scmp.ne.s32.totalorder %s91, %s93
      %p100 = scmp.eq.s32.totalorder %s20, 1
      %p101 = por %p99, %p100
      %p102 = scmp.ne.s32.totalorder %s93, %s94
      %p103 = scmp.eq.s32.totalorder %s20, 0
      %p104 = por %p102, %p103
      %p105 = scmp.ne.s32.totalorder %s93, %s94
      %p106 = scmp.eq.s32.totalorder %s21, 1
      %p107 = por %p105, %p106
      %p109 = scmp.ne.s32.totalorder %s94, %s108
      %p110 = scmp.eq.s32.totalorder %s21, 0
      %p111 = por %p109, %p110
      %s113 = sadd.s32 %s112, 1
      %p116 = scmp.eq.s32.totalorder %s15, 1
      %p117 = scmp.ne.s32.totalorder %s112, %s114
      %p118 = scmp.eq.s32.totalorder %s15, 0
      %p119 = por %p117, %p118
      %p120 = scmp.ne.s32.totalorder %s112, %s114
      %p121 = scmp.eq.s32.totalorder %s20, 1
      %p122 = por %p120, %p121
      %p123 = scmp.ne.s32.totalorder %s114, %s115
      %p124 = scmp.eq.s32.totalorder %s20, 0
      %p125 = por %p123, %p124
      %p126 = scmp.ne.s32.totalorder %s114, %s115
      %p127 = scmp.eq.s32.totalorder %s21, 1
      %p128 = por %p126, %p127
      %p130 = scmp.ne.s32.totalorder %s115, %s129
      %p131 = scmp.eq.s32.totalorder %s21, 0
      %p132 = por %p130, %p131
      %s134 = sadd.s32 %s133, 1
      %p137 = scmp.eq.s32.totalorder %s15, 1
      %p138 = scmp.ne.s32.totalorder %s133, %s135
      %p139 = scmp.eq.s32.totalorder %s15, 0
      %p140 = por %p138, %p139
      %p141 = scmp.ne.s32.totalorder %s133, %s135
      %p142 = scmp.eq.s32.totalorder %s20, 1
      %p143 = por %p141, %p142
      %p144 = scmp.ne.s32.totalorder %s135, %s136
      %p145 = scmp.eq.s32.totalorder %s20, 0
      %p146 = por %p144, %p145
      %p147 = scmp.ne.s32.totalorder %s135, %s136
      %p148 = scmp.eq.s32.totalorder %s21, 1
      %p149 = por %p147, %p148
      %p151 = scmp.ne.s32.totalorder %s136, %s150
      %p152 = scmp.eq.s32.totalorder %s21, 0
      %p153 = por %p151, %p152
      %s154 = ssub.s32 %s15, %s22
      %p155 = scmp.eq.s32.totalorder %s154, 0
      %s157 = sadd.s32 %s156, 1
      %s158 = scalar_select %p155, %s156, %s157
      %p161 = pneg %p155
      %p162 = scmp.eq.s32.totalorder %s15, 1
      %p163 = por %p161, %p162
      %p164 = scmp.ne.s32.totalorder %s156, %s159
      %p165 = scmp.eq.s32.totalorder %s15, 0
      %p166 = por %p164, %p165
      %p167 = scmp.ne.s32.totalorder %s156, %s159
      %p168 = scmp.eq.s32.totalorder %s20, 1
      %p169 = por %p167, %p168
      %p170 = scmp.ne.s32.totalorder %s159, %s160
      %p171 = scmp.eq.s32.totalorder %s20, 0
      %p172 = por %p170, %p171
      %p173 = scmp.ne.s32.totalorder %s159, %s160
      %p174 = scmp.eq.s32.totalorder %s21, 1
      %p175 = por %p173, %p174
      %p177 = scmp.ne.s32.totalorder %s160, %s176
      %p178 = scmp.eq.s32.totalorder %s21, 0
      %p179 = por %p177, %p178
      %p180 = scmp.le.s32.totalorder 1, %s15
      %p181 = scmp.lt.s32.totalorder %s15, 3
      %p182 = pnand %p180, %p181
      %p183 = pneg %p182
      // Predicated region
      $region9: #{tpu_custom_call.1} parent=5 // pred_check
        _
      $region10: #{tpu_custom_call.1} parent=5 // pred_check_branch
        %185 = sbr.rel (%p182) target = $region12
      $region11: #{tpu_custom_call.1} parent=5 // pred_region
        %s186 = ssub.s32 %s15, 1
        // Predicated region
        $region13: #{tpu_custom_call.1} parent=11 // pred_check
          %p187 = pneg %p62
        $region14: #{tpu_custom_call.1} parent=11 // pred_check_branch
          %189 = sbr.rel (%p187) target = $region16
        $region15: #{tpu_custom_call.1} parent=11 // pred_region
          _
        $region16: #{tpu_custom_call.1} parent=11 // pred_fallthru
          _
        // Predicated region
        $region17: #{tpu_custom_call.1} parent=11 // pred_check
          %p190 = pneg %p83
        $region18: #{tpu_custom_call.1} parent=11 // pred_check_branch
          %192 = sbr.rel (%p190) target = $region20
        $region19: #{tpu_custom_call.1} parent=11 // pred_region
          _
        $region20: #{tpu_custom_call.1} parent=11 // pred_fallthru
          _
        // Predicated region
        $region21: #{tpu_custom_call.1} parent=11 // pred_check
          %p193 = pneg %p104
        $region22: #{tpu_custom_call.1} parent=11 // pred_check_branch
          %195 = sbr.rel (%p193) target = $region24
        $region23: #{tpu_custom_call.1} parent=11 // pred_region
          _
        $region24: #{tpu_custom_call.1} parent=11 // pred_fallthru
          _
        // Predicated region
        $region25: #{tpu_custom_call.1} parent=11 // pred_check
          %p196 = pneg %p125
        $region26: #{tpu_custom_call.1} parent=11 // pred_check_branch
          %198 = sbr.rel (%p196) target = $region28
        $region27: #{tpu_custom_call.1} parent=11 // pred_region
          _
        $region28: #{tpu_custom_call.1} parent=11 // pred_fallthru
          _
        // Predicated region
        $region29: #{tpu_custom_call.1} parent=11 // pred_check
          %p199 = pneg %p146
        $region30: #{tpu_custom_call.1} parent=11 // pred_check_branch
          %201 = sbr.rel (%p199) target = $region32
        $region31: #{tpu_custom_call.1} parent=11 // pred_region
          _
        $region32: #{tpu_custom_call.1} parent=11 // pred_fallthru
          _
      $region12: #{tpu_custom_call.1} parent=5 // pred_fallthru
        _
      %p202 = scmp.lt.s32.totalorder %s15, 2
      // Predicated region
      $region33: #{tpu_custom_call.1} parent=5 // pred_check
        %p203 = pneg %p202
      $region34: #{tpu_custom_call.1} parent=5 // pred_check_branch
        %205 = sbr.rel (%p203) target = $region36
      $region35: #{tpu_custom_call.1} parent=5 // pred_region
        // Predicated region
        $region37: #{tpu_custom_call.1} parent=35 // pred_check
          %p206 = pneg %p35
        $region38: #{tpu_custom_call.1} parent=35 // pred_check_branch
          %208 = sbr.rel (%p206) target = $region40
        $region39: #{tpu_custom_call.1} parent=35 // pred_region
          %p209 = scmp.lt.s32.totalorder %s15, 1
          %s210 = scalar_select %p209, %s15, 1
          %s211 = smul.addr %s210, 54
          %s212 = smul.addr %s211, 8
          %s213 = scalar_lea.vmem %s0, %s212
        $region40: #{tpu_custom_call.1} parent=35 // pred_fallthru
          _
      $region36: #{tpu_custom_call.1} parent=5 // pred_fallthru
        _
      %p214 = scmp.le.s32.totalorder 1, %s15
      %p215 = scmp.lt.s32.totalorder %s15, 3
      %p216 = pnand %p214, %p215
      %p217 = pneg %p216
      // Predicated region
      $region41: #{tpu_custom_call.1} parent=5 // pred_check
        _
      $region42: #{tpu_custom_call.1} parent=5 // pred_check_branch
        %219 = sbr.rel (%p216) target = $region44
      $region43: #{tpu_custom_call.1} parent=5 // pred_region
        %s220 = ssub.s32 %s15, 1
        %p221 = scmp.lt.s32.totalorder %s20, 1
        %s222 = scalar_select %p221, %s20, 1
        %s223 = smul.addr %s222, 54
        %s224 = smul.addr %s223, 8
        %s225 = scalar_lea.vmem %s0, %s224
        %p226 = pneg %p41
        %p227 = pneg %p38
        %p228 = pneg %p62
        %p229 = pneg %p59
        %p230 = pneg %p83
        %p231 = pneg %p80
        %p232 = pneg %p104
        %p233 = pneg %p101
        %p234 = pneg %p125
        %p235 = pneg %p122
        %p236 = pneg %p146
        %p237 = pneg %p143
        %p238 = pneg %p172
        %p239 = pneg %p169
        %s240 = sand.u32 %s159, 1
        %s241 = scalar_lea.sflag [#allocation3], %s240
        %s242 = sand.u32 %s159, 1
        %s243 = smul.addr %s242, 256
        %s244 = scalar_lea.vmem [#allocation2], %s243
        %p245 = scmp.lt.s32.totalorder %s20, 1
        %s246 = scalar_select %p245, %s20, 1
        %s247 = smul.addr %s246, 54
        %s248 = smul.addr %s247, 8
        %s249 = scalar_lea.vmem %s0, %s248
        %v250 = vld [vmem:[%s1] sm:$0xff]
        %v251 = vld [vmem:[%s1 + $0x8] sm:$0x1]
        %v252 = vld [vmem:[%s3] sm:$0xff]
        %v253 = vld [vmem:[%s3 + $0x8] sm:$0x1]
        %v254 = vld [vmem:[%s2] sm:$0x1]
        %v255 = vld [vmem:[%s4] sm:$0x1]
        %v256 = vld [vmem:[%s5] sm:$0x1]
        loop: start=0, step=1, limit=16
        $region45: #{tpu_custom_call.1} parent=43 // loop_pre_header
          _
        $region46: #{tpu_custom_call.1} parent=43 // loop_header
          %s258 = sphi 0, %s262
          %p259 = scmp.ge.s32.totalorder %s258, 16
        $region47: #{tpu_custom_call.1} parent=43 // loop_header_branch
          %261 = sbr.rel (%p259) target = $region51
        $region48: #{tpu_custom_call.1} parent=43 // loop_body
          %v264 = vlaneseq
          %v265 = vshrl.u32 %v264, 7
          %v266 = vsub.s32 0, %v265
          %v267 = vrot.slane %v254, %v266
          %v270 = vlaneseq
          %v271 = vshrl.u32 %v270, 7
          %v272 = vsub.s32 0, %v271
          %v273 = vrot.slane %v255, %v272
          %s275 = smul.u32 %s258, 24
          %s276 = scalar_lea.vmem %s249, %s275
          %v277 = vld [vmem:[%s276] sm:$0xff]
          %v278 = vld [vmem:[%s276 + $0x8] sm:$0xff]
          %v279 = vld [vmem:[%s276 + $0x10] sm:$0x3]
          %v280 = vlaneseq
          %v281 = vshrl.u32 %v280, 7
          %v282 = vsub.s32 0, %v281
          %v283 = vrot.slane %v250, %v282
          %v284 = vmul.f32 %v277, %v283
          %v285 = vmul.f32 %v278, %v283
          %v286 = vadd.f32 %v267, %v284
          %v287 = vadd.f32 %v267, %v285
          %v288 = vlaneseq
          %v289 = vshrl.u32 %v288, 7
          %v290 = vsub.s32 0, %v289
          %v291 = vrot.slane %v252, %v290
          %v292 = vmul.f32 %v277, %v291
          %v293 = vmul.f32 %v278, %v291
          %v294 = vadd.f32 %v273, %v292
          %v295 = vadd.f32 %v273, %v293
          %v296 = vlaneseq
          %v297 = vshrl.u32 %v296, 7
          %v298 = vsub.s32 1, %v297
          %v299 = vrot.slane %v250, %v298
          %v300 = vmul.f32 %v277, %v299
          %v301 = vmul.f32 %v278, %v299
          %v302 = vmul.f32 %v279, %v299
          %vm306 = vcmask 1046528
          %v307 = vrot.slane %v300, 1
          %v308 = vrot.slane %v301, 1
          %v309 = vsel %vm306, %v307, %v308
          %v310 = vrot.slane %v302, 1
          %v311 = vsel %vm306, %v308, %v310
          %v314 = vadd.f32 %v286, %v309
          %v315 = vadd.f32 %v287, %v311
          %v316 = vlaneseq
          %v317 = vshrl.u32 %v316, 7
          %v318 = vsub.s32 1, %v317
          %v319 = vrot.slane %v252, %v318
          %v320 = vmul.f32 %v277, %v319
          %v321 = vmul.f32 %v278, %v319
          %v322 = vmul.f32 %v279, %v319
          %v326 = vrot.slane %v320, 1
          %v327 = vrot.slane %v321, 1
          %v328 = vsel %vm306, %v326, %v327
          %v329 = vrot.slane %v322, 1
          %v330 = vsel %vm306, %v327, %v329
          %v333 = vadd.f32 %v294, %v328
          %v334 = vadd.f32 %v295, %v330
          %v335 = vlaneseq
          %v336 = vshrl.u32 %v335, 7
          %v337 = vsub.s32 2, %v336
          %v338 = vrot.slane %v250, %v337
          %v339 = vmul.f32 %v277, %v338
          %v340 = vmul.f32 %v278, %v338
          %v341 = vmul.f32 %v279, %v338
          %vm345 = vcmask 1045504
          %v346 = vrot.slane %v339, 2
          %v347 = vrot.slane %v340, 2
          %v348 = vsel %vm345, %v346, %v347
          %v349 = vrot.slane %v341, 2
          %v350 = vsel %vm345, %v347, %v349
          %v353 = vadd.f32 %v314, %v348
          %v354 = vadd.f32 %v315, %v350
          %v355 = vlaneseq
          %v356 = vshrl.u32 %v355, 7
          %v357 = vsub.s32 2, %v356
          %v358 = vrot.slane %v252, %v357
          %v359 = vmul.f32 %v277, %v358
          %v360 = vmul.f32 %v278, %v358
          %v361 = vmul.f32 %v279, %v358
          %v365 = vrot.slane %v359, 2
          %v366 = vrot.slane %v360, 2
          %v367 = vsel %vm345, %v365, %v366
          %v368 = vrot.slane %v361, 2
          %v369 = vsel %vm345, %v366, %v368
          %v372 = vadd.f32 %v333, %v367
          %v373 = vadd.f32 %v334, %v369
          %s374 = sadd.s32 %s258, 1
          %s375 = smul.u32 %s374, 24
          %s376 = scalar_lea.vmem %s249, %s375
          %v377 = vld [vmem:[%s376] sm:$0xff]
          %v378 = vld [vmem:[%s376 + $0x8] sm:$0xff]
          %v379 = vld [vmem:[%s376 + $0x10] sm:$0x3]
          %v380 = vlaneseq
          %v381 = vshrl.u32 %v380, 7
          %v382 = vsub.s32 3, %v381
          %v383 = vrot.slane %v250, %v382
          %v384 = vmul.f32 %v377, %v383
          %v385 = vmul.f32 %v378, %v383
          %v386 = vadd.f32 %v353, %v384
          %v387 = vadd.f32 %v354, %v385
          %v388 = vlaneseq
          %v389 = vshrl.u32 %v388, 7
          %v390 = vsub.s32 3, %v389
          %v391 = vrot.slane %v252, %v390
          %v392 = vmul.f32 %v377, %v391
          %v393 = vmul.f32 %v378, %v391
          %v394 = vadd.f32 %v372, %v392
          %v395 = vadd.f32 %v373, %v393
          %v396 = vlaneseq
          %v397 = vshrl.u32 %v396, 7
          %v398 = vsub.s32 4, %v397
          %v399 = vrot.slane %v250, %v398
          %v400 = vmul.f32 %v377, %v399
          %v401 = vmul.f32 %v378, %v399
          %v402 = vmul.f32 %v379, %v399
          %v406 = vrot.slane %v400, 1
          %v407 = vrot.slane %v401, 1
          %v408 = vsel %vm306, %v406, %v407
          %v409 = vrot.slane %v402, 1
          %v410 = vsel %vm306, %v407, %v409
          %v413 = vadd.f32 %v386, %v408
          %v414 = vadd.f32 %v387, %v410
          %v415 = vlaneseq
          %v416 = vshrl.u32 %v415, 7
          %v417 = vsub.s32 4, %v416
          %v418 = vrot.slane %v252, %v417
          %v419 = vmul.f32 %v377, %v418
          %v420 = vmul.f32 %v378, %v418
          %v421 = vmul.f32 %v379, %v418
          %v425 = vrot.slane %v419, 1
          %v426 = vrot.slane %v420, 1
          %v427 = vsel %vm306, %v425, %v426
          %v428 = vrot.slane %v421, 1
          %v429 = vsel %vm306, %v426, %v428
          %v432 = vadd.f32 %v394, %v427
          %v433 = vadd.f32 %v395, %v429
          %v434 = vlaneseq
          %v435 = vshrl.u32 %v434, 7
          %v436 = vsub.s32 5, %v435
          %v437 = vrot.slane %v250, %v436
          %v438 = vmul.f32 %v377, %v437
          %v439 = vmul.f32 %v378, %v437
          %v440 = vmul.f32 %v379, %v437
          %v444 = vrot.slane %v438, 2
          %v445 = vrot.slane %v439, 2
          %v446 = vsel %vm345, %v444, %v445
          %v447 = vrot.slane %v440, 2
          %v448 = vsel %vm345, %v445, %v447
          %v451 = vadd.f32 %v413, %v446
          %v452 = vadd.f32 %v414, %v448
          %v453 = vlaneseq
          %v454 = vshrl.u32 %v453, 7
          %v455 = vsub.s32 5, %v454
          %v456 = vrot.slane %v252, %v455
          %v457 = vmul.f32 %v377, %v456
          %v458 = vmul.f32 %v378, %v456
          %v459 = vmul.f32 %v379, %v456
          %v463 = vrot.slane %v457, 2
          %v464 = vrot.slane %v458, 2
          %v465 = vsel %vm345, %v463, %v464
          %v466 = vrot.slane %v459, 2
          %v467 = vsel %vm345, %v464, %v466
          %v470 = vadd.f32 %v432, %v465
          %v471 = vadd.f32 %v433, %v467
          %s472 = sadd.s32 %s258, 2
          %s473 = smul.u32 %s472, 24
          %s474 = scalar_lea.vmem %s249, %s473
          %v475 = vld [vmem:[%s474] sm:$0xff]
          %v476 = vld [vmem:[%s474 + $0x8] sm:$0xff]
          %v477 = vld [vmem:[%s474 + $0x10] sm:$0x3]
          %v478 = vlaneseq
          %v479 = vshrl.u32 %v478, 7
          %v480 = vsub.s32 6, %v479
          %v481 = vrot.slane %v250, %v480
          %v482 = vmul.f32 %v475, %v481
          %v483 = vmul.f32 %v476, %v481
          %v484 = vadd.f32 %v451, %v482
          %v485 = vadd.f32 %v452, %v483
          %v486 = vlaneseq
          %v487 = vshrl.u32 %v486, 7
          %v488 = vsub.s32 6, %v487
          %v489 = vrot.slane %v252, %v488
          %v490 = vmul.f32 %v475, %v489
          %v491 = vmul.f32 %v476, %v489
          %v492 = vadd.f32 %v470, %v490
          %v493 = vadd.f32 %v471, %v491
          %v494 = vlaneseq
          %v495 = vshrl.u32 %v494, 7
          %v496 = vsub.s32 7, %v495
          %v497 = vrot.slane %v250, %v496
          %v498 = vmul.f32 %v475, %v497
          %v499 = vmul.f32 %v476, %v497
          %v500 = vmul.f32 %v477, %v497
          %v504 = vrot.slane %v498, 1
          %v505 = vrot.slane %v499, 1
          %v506 = vsel %vm306, %v504, %v505
          %v507 = vrot.slane %v500, 1
          %v508 = vsel %vm306, %v505, %v507
          %v511 = vadd.f32 %v484, %v506
          %v512 = vadd.f32 %v485, %v508
          %v513 = vlaneseq
          %v514 = vshrl.u32 %v513, 7
          %v515 = vsub.s32 7, %v514
          %v516 = vrot.slane %v252, %v515
          %v517 = vmul.f32 %v475, %v516
          %v518 = vmul.f32 %v476, %v516
          %v519 = vmul.f32 %v477, %v516
          %v523 = vrot.slane %v517, 1
          %v524 = vrot.slane %v518, 1
          %v525 = vsel %vm306, %v523, %v524
          %v526 = vrot.slane %v519, 1
          %v527 = vsel %vm306, %v524, %v526
          %v530 = vadd.f32 %v492, %v525
          %v531 = vadd.f32 %v493, %v527
          %v532 = vlaneseq
          %v533 = vshrl.u32 %v532, 7
          %v534 = vsub.s32 0, %v533
          %v535 = vrot.slane %v251, %v534
          %v536 = vmul.f32 %v475, %v535
          %v537 = vmul.f32 %v476, %v535
          %v538 = vmul.f32 %v477, %v535
          %v542 = vrot.slane %v536, 2
          %v543 = vrot.slane %v537, 2
          %v544 = vsel %vm345, %v542, %v543
          %v545 = vrot.slane %v538, 2
          %v546 = vsel %vm345, %v543, %v545
          %v549 = vadd.f32 %v511, %v544
          %v550 = vadd.f32 %v512, %v546
          %v551 = vlaneseq
          %v552 = vshrl.u32 %v551, 7
          %v553 = vsub.s32 0, %v552
          %v554 = vrot.slane %v253, %v553
          %v555 = vmul.f32 %v475, %v554
          %v556 = vmul.f32 %v476, %v554
          %v557 = vmul.f32 %v477, %v554
          %v561 = vrot.slane %v555, 2
          %v562 = vrot.slane %v556, 2
          %v563 = vsel %vm345, %v561, %v562
          %v564 = vrot.slane %v557, 2
          %v565 = vsel %vm345, %v562, %v564
          %v568 = vadd.f32 %v530, %v563
          %v569 = vadd.f32 %v531, %v565
          %v571 = vlaneseq
          %v572 = vshrl.u32 %v571, 7
          %v573 = vsub.s32 0, %v572
          %v574 = vrot.slane %v256, %v573
          %v576 = vmul.f32 %v549, %v574
          %v577 = vmul.f32 %v550, %v574
          %578 = vadd.xlane.f32.xlu0 %v576
          %v579 = vpop.xlane.xlu0 %578
          %580 = vadd.xlane.f32.xlu0 %v577
          %v581 = vpop.xlane.xlu0 %580
          %v582 = vxor.u32 %v579, 2147483648
          %v583 = vxor.u32 %v581, 2147483648
          %v584 = vmul.f32 %v582, 1.442695
          %v585 = vpow.pop %v584
          %v586 = vmul.f32 %v583, 1.442695
          %v587 = vpow.pop %v586
          %v588 = vadd.f32 %v585, 1.0
          %v589 = vadd.f32 %v587, 1.0
          %v590 = vrcp.pop %v588
          %v591 = vmul.f32 1.0, %v590
          %v592 = vrcp.pop %v589
          %v593 = vmul.f32 1.0, %v592
          %v594 = vmul.f32 %v591, %v568
          %v595 = vmul.f32 %v593, %v569
          %s596 = smul.u32 %s258, 16
          %s597 = scalar_lea.vmem %s244, %s596 [#allocation2]
          %598 = vst [vmem:[%s597] sm:$0xff] %v594
          %599 = vst [vmem:[%s597 + $0x8] sm:$0xff] %v595
        $region49: #{tpu_custom_call.1} parent=43 // loop_footer
          %s262 = sadd.s32 1, %s258
        $region50: #{tpu_custom_call.1} parent=43 // loop_footer_branch
          %257 = sbr.rel target = $region46
        $region51: #{tpu_custom_call.1} parent=43 // loop_exit
          _
        %s600 = sand.u32 %s159, 1
        %s601 = scalar_lea.sflag [#allocation3], %s600
        %s602 = sand.u32 %s159, 1
        %s603 = smul.addr %s602, 256
        %s604 = scalar_lea.vmem [#allocation2], %s603
        // Predicated region
        $region52: #{tpu_custom_call.1} parent=43 // pred_check
          %p605 = pneg %p169
        $region53: #{tpu_custom_call.1} parent=43 // pred_check_branch
          %607 = sbr.rel (%p605) target = $region55
        $region54: #{tpu_custom_call.1} parent=43 // pred_region
          %s609 = ssub.s32 4096, 4096
          %610 = vsyncadd %s601, %s609
          %s611 = smul.addr %s20, 32
          %s612 = smul.addr %s611, 128
          %s613 = scalar_lea.hbm %s6, %s612
          %s614 = sshll.u32 %s604, 4
          %s615 = int_to_ptr.vmem [resolvable:$true] %s614
          %620 = dma.vmem_to_hbm [thread:$0]  %s615, 4096, %s613, %s601, 128, 128, 8
        $region55: #{tpu_custom_call.1} parent=43 // pred_fallthru
          _
      $region44: #{tpu_custom_call.1} parent=5 // pred_fallthru
        _
      %p621 = scmp.le.s32.totalorder 2, %s15
      // Predicated region
      $region56: #{tpu_custom_call.1} parent=5 // pred_check
        %p622 = pneg %p621
      $region57: #{tpu_custom_call.1} parent=5 // pred_check_branch
        %624 = sbr.rel (%p622) target = $region59
      $region58: #{tpu_custom_call.1} parent=5 // pred_region
        %s625 = ssub.s32 %s15, 2
        // Predicated region
        $region60: #{tpu_custom_call.1} parent=58 // pred_check
          %p626 = pneg %p175
        $region61: #{tpu_custom_call.1} parent=58 // pred_check_branch
          %628 = sbr.rel (%p626) target = $region63
        $region62: #{tpu_custom_call.1} parent=58 // pred_region
          %s629 = sand.u32 %s160, 1
          %s630 = scalar_lea.sflag [#allocation3], %s629
          %s631 = sand.u32 %s160, 1
          %s632 = smul.addr %s631, 256
          %s633 = scalar_lea.vmem [#allocation2], %s632
          %634 = dma.done %s630, 4096
        $region63: #{tpu_custom_call.1} parent=58 // pred_fallthru
          _
      $region59: #{tpu_custom_call.1} parent=5 // pred_fallthru
        _
    $region6: #{tpu_custom_call.1} parent=1 // loop_footer
      %s19 = sadd.s32 1, %s15
    $region7: #{tpu_custom_call.1} parent=1 // loop_footer_branch
      %14 = sbr.rel target = $region3
    $region8: #{tpu_custom_call.1} parent=1 // loop_exit
      _
    %635 = vsyncpa [#allocation3], 1
    %s636 = scalar_lea.sflag [#allocation3], 1
    %637 = vsyncpa %s636, 1

</llo_original>
